<compile_context>
chip_gen: v7x
topology: tpu7x:2x2x1
jax: 0.10.0
libtpu: 0.0.40
codegen_flags: <defaults>
</compile_context>

<pallas_src>
import functools

import jax
import jax.numpy as jnp
from jax.experimental import pallas as pl
from jax.experimental.pallas import tpu as pltpu


def _sphereface_kernel(labels_ref, corrected_ref, logits_ref, out_ref, *, s, tile_c):
    # Non-target path: s * cos(arccos(clamp(x))) == s * clamp(x).
    x = jnp.clip(logits_ref[...], -1.0 + 1e-7, 1.0 - 1e-7)         # (TN, TC)

    # Shift the (TN, 1) label instead of adding col0 to a full-tile iota.
    # Local iota values are >= 0, so a -1 ("ignore") label can never match.
    local_labels = labels_ref[...] - pl.program_id(1) * tile_c      # (TN, 1) int32
    col_ids = jax.lax.broadcasted_iota(jnp.int32, x.shape, 1)       # local column ids
    is_target = col_ids == local_labels                             # (TN, TC) bool

    corrected = corrected_ref[...].astype(x.dtype)                  # (TN, 1)
    out_ref[...] = jnp.where(is_target, corrected, s * x).astype(out_ref.dtype)


def _pick_tile_c(C, tile_c):
    """Largest multiple of 128 <= tile_c that divides C; else full/ragged fallback."""
    if C <= tile_c:
        return C
    t = (tile_c // 128) * 128
    while t >= 128:
        if C % t == 0:
            return t
        t -= 128
    return min(tile_c, C)


def _pick_tile_n(N, C, tile_n, tc):
    """Row tile; force >= 2 grid steps when the grid would otherwise be (1, 1)."""
    tn = min(tile_n, N)
    if tc >= C and tn >= N and N > 8:
        # Split rows across (at least) two grid steps so both v7x TensorCores
        # get work and the DMA pipeline has something to overlap.
        half = -(-N // 2)                 # cdiv(N, 2)
        tn = min(N, ((half + 7) // 8) * 8)
        if tn >= N:                       # N itself < 16; keep the full dim
            tn = N
    return tn


def sphereface_forward(logits, labels, s=64.0, margin=1.7,
                       tile_n=512, tile_c=2048, donate_logits=False):
    """Pallas implementation of SphereFace.forward. Returns (scaled_logits, None)."""
    N, C = logits.shape
    labels_i32 = labels.astype(jnp.int32)
    labels2d = labels_i32.reshape(N, 1)

    # Hoisted per-row target correction (tiny XLA gather + transcendentals on N
    # elements).  Rows with label == -1 get a garbage-but-unused value: the
    # kernel's is_target mask can never select it for those rows.
    safe_idx = jnp.clip(labels_i32, 0, C - 1).reshape(N, 1)
    tgt = jnp.take_along_axis(logits, safe_idx, axis=1).astype(jnp.float32)
    tgt = jnp.clip(tgt, -1.0 + 1e-7, 1.0 - 1e-7)
    corrected = (s * jnp.cos(margin * jnp.arccos(tgt))).astype(jnp.float32)  # (N, 1)

    tc = _pick_tile_c(C, tile_c)
    tn = _pick_tile_n(N, C, tile_n, tc)

    # Size the VMEM limit to the actual double-buffered (in + out) block need,
    # with headroom, staying well under v7x's 64 MiB physical VMEM at defaults.
    itemsize = jnp.dtype(logits.dtype).itemsize
    block_bytes = tn * tc * itemsize
    vmem_limit = int(min(max(4 * block_bytes + (2 << 20), 32 << 20), 60 << 20))

    kernel = functools.partial(_sphereface_kernel, s=s, tile_c=tc)
    out = pl.pallas_call(
        kernel,
        out_shape=jax.ShapeDtypeStruct((N, C), logits.dtype),
        # Class axis innermost so the (tn, 1) label/correction DMAs are elided
        # across column steps and output writeback streams row-major.
        grid=(pl.cdiv(N, tn), pl.cdiv(C, tc)),
        in_specs=[
            pl.BlockSpec((tn, 1), lambda i, j: (i, 0)),    # labels     (N, 1)
            pl.BlockSpec((tn, 1), lambda i, j: (i, 0)),    # corrected  (N, 1)
            pl.BlockSpec((tn, tc), lambda i, j: (i, j)),   # logits     (N, C)
        ],
        out_specs=pl.BlockSpec((tn, tc), lambda i, j: (i, j)),
        compiler_params=pltpu.CompilerParams(
            dimension_semantics=("parallel", "parallel"),
            vmem_limit_bytes=vmem_limit,
        ),
        # Donation requires output dtype == logits dtype (always true here).
        input_output_aliases=({2: 0} if donate_logits else {}),
    )(labels2d, corrected, logits)
    return out, None


def _reference(logits, labels, s=64.0, margin=1.7):
    x = jnp.clip(logits.astype(jnp.float32), -1.0 + 1e-7, 1.0 - 1e-7)
    theta = jnp.arccos(x)
    col = jnp.arange(logits.shape[1])[None, :]
    is_target = (col == labels[:, None]) & (labels[:, None] != -1)
    theta = jnp.where(is_target, theta * margin, theta)
    return s * jnp.cos(theta)


if __name__ == "__main__":
    key = jax.random.PRNGKey(0)
    k1, k2, k3, k4 = jax.random.split(key, 4)

    # Test 1: explicit multi-tile grid (2 x 2 tiles of 8 x 128).
    N, C = 16, 256
    logits = jax.random.uniform(k1, (N, C), jnp.float32, minval=-1.0, maxval=1.0)
    labels = jax.random.randint(k2, (N,), 0, C, dtype=jnp.int32)
    labels = labels.at[0].set(-1)  # one ignored row, like labels == -1 in PyTorch

    out, aux = sphereface_forward(logits, labels, tile_n=8, tile_c=128)
    out = jax.block_until_ready(out)
    assert aux is None
    assert out.shape == (N, C) and out.dtype == jnp.float32
    ref = _reference(logits, labels)
    assert jnp.max(jnp.abs(out - ref)) < 2e-3

    # Test 2: default tile heuristics (grid split along rows for megacore).
    out_d, _ = sphereface_forward(logits, labels)
    out_d = jax.block_until_ready(out_d)
    assert jnp.max(jnp.abs(out_d - ref)) < 2e-3

    # Test 3: ragged rows (N not a multiple of the row tile).
    N2, C2 = 13, 256
    logits2 = jax.random.uniform(k3, (N2, C2), jnp.float32, minval=-1.0, maxval=1.0)
    labels2 = jax.random.randint(k4, (N2,), 0, C2, dtype=jnp.int32)
    labels2 = labels2.at[3].set(-1)

    out2, _ = sphereface_forward(logits2, labels2, tile_n=8, tile_c=128)
    out2 = jax.block_until_ready(out2)
    ref2 = _reference(logits2, labels2)
    assert jnp.max(jnp.abs(out2 - ref2)) < 2e-3

    # Test 4: bf16 I/O (HBM-bandwidth halving path).
    out3, _ = sphereface_forward(logits.astype(jnp.bfloat16), labels)
    out3 = jax.block_until_ready(out3)
    assert out3.dtype == jnp.bfloat16
    assert jnp.max(jnp.abs(out3.astype(jnp.float32) - ref)) < 1.0  # bf16 resolution at |out|<=64

    print("KERNEL_OK")
</pallas_src>

<mosaic_0001>
module attributes {stable_mosaic.version = 11 : i64} {
  func.func @_sphereface_kernel(%arg0: i32, %arg1: i32, %arg2: memref<8x1xi32, #tpu.memory_space<vmem>>, %arg3: memref<8x1xf32, #tpu.memory_space<vmem>>, %arg4: memref<8x128xf32, #tpu.memory_space<vmem>>, %arg5: memref<8x128xf32, #tpu.memory_space<vmem>>) attributes {dimension_semantics = [#tpu.dimension_semantics<parallel>, #tpu.dimension_semantics<parallel>], iteration_bounds = array<i64: 2, 2>, scalar_prefetch = 0 : i64, scratch_operands = 0 : i64, tpu.core_type = #tpu.core_type<tc>, window_params = [{transform_indices = @transform_0, window_bounds = array<i64: 8, 1>}, {transform_indices = @transform_1, window_bounds = array<i64: 8, 1>}, {transform_indices = @transform_2, window_bounds = array<i64: 8, 128>}, {transform_indices = @transform_3, window_bounds = array<i64: 8, 128>}]} {
    %c0 = arith.constant 0 : index
    %c0_0 = arith.constant 0 : index
    %0 = vector.load %arg4[%c0, %c0_0] : memref<8x128xf32, #tpu.memory_space<vmem>>, vector<8x128xf32>
    %cst = arith.constant -0.99999988 : f32
    %cst_1 = arith.constant 0.99999988 : f32
    %1 = vector.broadcast %cst : f32 to vector<8x128xf32>
    %2 = arith.maximumf %1, %0 : vector<8x128xf32>
    %3 = vector.broadcast %cst_1 : f32 to vector<8x128xf32>
    %4 = arith.minimumf %3, %2 : vector<8x128xf32>
    %c0_2 = arith.constant 0 : index
    %c0_3 = arith.constant 0 : index
    %5 = vector.load %arg2[%c0_2, %c0_3] : memref<8x1xi32, #tpu.memory_space<vmem>>, vector<8x1xi32>
    %c128_i32 = arith.constant 128 : i32
    %6 = arith.muli %arg1, %c128_i32 : i32
    %7 = vector.broadcast %6 : i32 to vector<8x1xi32>
    %8 = arith.subi %5, %7 : vector<8x1xi32>
    %9 = tpu.iota {dimensions = array<i32: 1>} : vector<8x128xi32>
    %10 = vector.broadcast %8 : vector<8x1xi32> to vector<8x128xi32>
    %11 = arith.cmpi eq, %9, %10 : vector<8x128xi32>
    %c0_4 = arith.constant 0 : index
    %c0_5 = arith.constant 0 : index
    %12 = vector.load %arg3[%c0_4, %c0_5] : memref<8x1xf32, #tpu.memory_space<vmem>>, vector<8x1xf32>
    %cst_6 = arith.constant 6.400000e+01 : f32
    %13 = vector.broadcast %cst_6 : f32 to vector<8x128xf32>
    %14 = arith.mulf %13, %4 : vector<8x128xf32>
    %15 = vector.shape_cast %12 : vector<8x1xf32> to vector<8x1xf32>
    %16 = vector.broadcast %15 : vector<8x1xf32> to vector<8x128xf32>
    %17 = arith.select %11, %16, %14 : vector<8x128xi1>, vector<8x128xf32>
    %c0_7 = arith.constant 0 : index
    %c0_8 = arith.constant 0 : index
    %18 = vector.load %arg5[%c0_7, %c0_8] : memref<8x128xf32, #tpu.memory_space<vmem>>, vector<8x128xf32>
    tpu.vector_store %arg5[%c0_7, %c0_8], %17 {strides = array<i32>} : memref<8x128xf32, #tpu.memory_space<vmem>>, vector<8x128xf32>,
    return
  }
  func.func @transform_0(%arg0: i32, %arg1: i32) -> (i32, i32) {
    %c0_i32 = arith.constant 0 : i32
    %c0_i32_0 = arith.constant 0 : i32
    return %arg0, %c0_i32 : i32, i32
  }
  func.func @transform_1(%arg0: i32, %arg1: i32) -> (i32, i32) {
    %c0_i32 = arith.constant 0 : i32
    %c0_i32_0 = arith.constant 0 : i32
    return %arg0, %c0_i32 : i32, i32
  }
  func.func @transform_2(%arg0: i32, %arg1: i32) -> (i32, i32) {
    %c0_i32 = arith.constant 0 : i32
    return %arg0, %arg1 : i32, i32
  }
  func.func @transform_3(%arg0: i32, %arg1: i32) -> (i32, i32) {
    %c0_i32 = arith.constant 0 : i32
    return %arg0, %arg1 : i32, i32
  }
}

</mosaic_0001>

<llo_original>
// kernel: tpu_custom_call.1
$region0: #{tpu_custom_call.1}
  #allocation0 [shape = 'u32[]', space=smem, size = 0x4, offset = 0x4, fixed_abs, tag = 'smem constant byte address 0x4 - core index']
  #allocation1 [shape = 'u32[144,128]{1,0:T(1,128)}', space=vmem, size = 0x12000, scoped, tag = 'internal scratch']
  %s0 = inlined_call_operand.vmem [shape: s32[16,1], index: 0, kind: input, shape index: {}]
  %s1 = inlined_call_operand.vmem [shape: f32[16,1], index: 1, kind: input, shape index: {}]
  %s2 = inlined_call_operand.vmem [shape: f32[16,256], index: 2, kind: input, shape index: {}]
  %s3 = inlined_call_operand.hbm [shape: f32[16,256], index: 3, kind: output, shape index: {}]
  %s4 = sld [smem:[#allocation0]]
  $region45: #{tpu_custom_call.1} parent=0
    _
  %s6 = ssub.s32 1, %s4
  %s7 = scalar_select 0, %s6, %s4
  $region1: #{tpu_custom_call.1} parent=0
    #allocation2 [shape = 'u8[8192]{0}', space=vmem, size = 0x2000, scoped, tag = 'output window, operand 0']
    #allocation3 [shape = 's32[2]{0}', space=sflag, size = 0x8, scoped, tag = 'scoped memory for tpu_custom_call.1']
    %8 = vsyncpa [#allocation3], 0
    %s9 = scalar_lea.sflag [#allocation3], 1
    %10 = vsyncpa %s9, 0
    loop: start=0, step=1, limit=6
    $region2: #{tpu_custom_call.1} parent=1 // loop_pre_header
      _
    $region3: #{tpu_custom_call.1} parent=1 // loop_header
      %s12 = sphi 0, %s16
      %p13 = scmp.ge.s32.totalorder %s12, 6
      %s19 = sphi 0, %s31
      %s20 = sphi 0, %s27
      %s21 = sphi 0, %s19
      %s22 = sphi 0, %s20
      %s23 = sphi 0, %s21
      %s24 = sphi 0, %s22
      %s34 = sphi 0, %s36
      %s37 = sphi 0, %s34
      %s38 = sphi 0, %s37
      %s54 = sphi 0, %s38
      %s60 = sphi 0, %s62
      %s63 = sphi 0, %s60
      %s64 = sphi 0, %s63
      %s80 = sphi 0, %s64
      %s88 = sphi 0, %s90
      %s91 = sphi 0, %s88
      %s92 = sphi 0, %s91
      %s108 = sphi 0, %s92
      %s116 = sphi 0, %s118
      %s119 = sphi 0, %s116
      %s120 = sphi 0, %s119
      %s136 = sphi 0, %s120
    $region4: #{tpu_custom_call.1} parent=1 // loop_header_branch
      %15 = sbr.rel (%p13) target = $region8
    $region5: #{tpu_custom_call.1} parent=1 // loop_body
      %s17 = ssub.s32 %s12, 1
      %s18 = ssub.s32 %s12, 2
      %s25 = sadd.s32 1, %s20
      %p26 = scmp.ge.s32.totalorder %s25, 2
      %s27 = scalar_select %p26, 0, %s25
      %s28 = sadd.s32 1, %s19
      %s29 = scalar_select %p26, %s28, %s19
      %p30 = scmp.ge.s32.totalorder %s29, 2
      %s31 = scalar_select %p30, 0, %s29
      %s32 = ssub.s32 %s19, %s31
      %p33 = scmp.eq.s32.totalorder %s32, 0
      %s35 = sadd.s32 %s34, 1
      %s36 = scalar_select %p33, %s34, %s35
      %p39 = pneg %p33
      %p40 = scmp.eq.s32.totalorder %s12, 3
      %p41 = por %p39, %p40
      %p42 = scmp.ne.s32.totalorder %s34, %s37
      %p43 = scmp.eq.s32.totalorder %s12, 0
      %p44 = por %p42, %p43
      %p45 = scmp.ne.s32.totalorder %s34, %s37
      %p46 = scmp.eq.s32.totalorder %s17, 3
      %p47 = por %p45, %p46
      %p48 = scmp.ne.s32.totalorder %s37, %s38
      %p49 = scmp.eq.s32.totalorder %s17, 0
      %p50 = por %p48, %p49
      %p51 = scmp.ne.s32.totalorder %s37, %s38
      %p52 = scmp.eq.s32.totalorder %s18, 3
      %p53 = por %p51, %p52
      %p55 = scmp.ne.s32.totalorder %s38, %s54
      %p56 = scmp.eq.s32.totalorder %s18, 0
      %p57 = por %p55, %p56
      %s58 = ssub.s32 %s19, %s31
      %p59 = scmp.eq.s32.totalorder %s58, 0
      %s61 = sadd.s32 %s60, 1
      %s62 = scalar_select %p59, %s60, %s61
      %p65 = pneg %p59
      %p66 = scmp.eq.s32.totalorder %s12, 3
      %p67 = por %p65, %p66
      %p68 = scmp.ne.s32.totalorder %s60, %s63
      %p69 = scmp.eq.s32.totalorder %s12, 0
      %p70 = por %p68, %p69
      %p71 = scmp.ne.s32.totalorder %s60, %s63
      %p72 = scmp.eq.s32.totalorder %s17, 3
      %p73 = por %p71, %p72
      %p74 = scmp.ne.s32.totalorder %s63, %s64
      %p75 = scmp.eq.s32.totalorder %s17, 0
      %p76 = por %p74, %p75
      %p77 = scmp.ne.s32.totalorder %s63, %s64
      %p78 = scmp.eq.s32.totalorder %s18, 3
      %p79 = por %p77, %p78
      %p81 = scmp.ne.s32.totalorder %s64, %s80
      %p82 = scmp.eq.s32.totalorder %s18, 0
      %p83 = por %p81, %p82
      %s84 = ssub.s32 %s19, %s31
      %s85 = ssub.s32 %s20, %s27
      %s86 = sor.u32 %s84, %s85
      %p87 = scmp.eq.s32.totalorder %s86, 0
      %s89 = sadd.s32 %s88, 1
      %s90 = scalar_select %p87, %s88, %s89
      %p93 = pneg %p87
      %p94 = scmp.eq.s32.totalorder %s12, 3
      %p95 = por %p93, %p94
      %p96 = scmp.ne.s32.totalorder %s88, %s91
      %p97 = scmp.eq.s32.totalorder %s12, 0
      %p98 = por %p96, %p97
      %p99 = scmp.ne.s32.totalorder %s88, %s91
      %p100 = scmp.eq.s32.totalorder %s17, 3
      %p101 = por %p99, %p100
      %p102 = scmp.ne.s32.totalorder %s91, %s92
      %p103 = scmp.eq.s32.totalorder %s17, 0
      %p104 = por %p102, %p103
      %p105 = scmp.ne.s32.totalorder %s91, %s92
      %p106 = scmp.eq.s32.totalorder %s18, 3
      %p107 = por %p105, %p106
      %p109 = scmp.ne.s32.totalorder %s92, %s108
      %p110 = scmp.eq.s32.totalorder %s18, 0
      %p111 = por %p109, %p110
      %s112 = ssub.s32 %s19, %s31
      %s113 = ssub.s32 %s20, %s27
      %s114 = sor.u32 %s112, %s113
      %p115 = scmp.eq.s32.totalorder %s114, 0
      %s117 = sadd.s32 %s116, 1
      %s118 = scalar_select %p115, %s116, %s117
      %p121 = pneg %p115
      %p122 = scmp.eq.s32.totalorder %s12, 3
      %p123 = por %p121, %p122
      %p124 = scmp.ne.s32.totalorder %s116, %s119
      %p125 = scmp.eq.s32.totalorder %s12, 0
      %p126 = por %p124, %p125
      %p127 = scmp.ne.s32.totalorder %s116, %s119
      %p128 = scmp.eq.s32.totalorder %s17, 3
      %p129 = por %p127, %p128
      %p130 = scmp.ne.s32.totalorder %s119, %s120
      %p131 = scmp.eq.s32.totalorder %s17, 0
      %p132 = por %p130, %p131
      %p133 = scmp.ne.s32.totalorder %s119, %s120
      %p134 = scmp.eq.s32.totalorder %s18, 3
      %p135 = por %p133, %p134
      %p137 = scmp.ne.s32.totalorder %s120, %s136
      %p138 = scmp.eq.s32.totalorder %s18, 0
      %p139 = por %p137, %p138
      %p140 = scmp.le.s32.totalorder 1, %s12
      %p141 = scmp.lt.s32.totalorder %s12, 5
      %p142 = pnand %p140, %p141
      %p143 = pneg %p142
      // Predicated region
      $region9: #{tpu_custom_call.1} parent=5 // pred_check
        _
      $region10: #{tpu_custom_call.1} parent=5 // pred_check_branch
        %145 = sbr.rel (%p142) target = $region12
      $region11: #{tpu_custom_call.1} parent=5 // pred_region
        %s146 = ssub.s32 %s12, 1
      $region12: #{tpu_custom_call.1} parent=5 // pred_fallthru
        _
      %p147 = scmp.lt.s32.totalorder %s12, 4
      // Predicated region
      $region13: #{tpu_custom_call.1} parent=5 // pred_check
        %p148 = pneg %p147
      $region14: #{tpu_custom_call.1} parent=5 // pred_check_branch
        %150 = sbr.rel (%p148) target = $region16
      $region15: #{tpu_custom_call.1} parent=5 // pred_region
        // Predicated region
        $region17: #{tpu_custom_call.1} parent=15 // pred_check
          %p151 = pneg %p44
        $region18: #{tpu_custom_call.1} parent=15 // pred_check_branch
          %153 = sbr.rel (%p151) target = $region20
        $region19: #{tpu_custom_call.1} parent=15 // pred_region
          %p154 = scmp.lt.s32.totalorder %s19, 1
          %s155 = scalar_select %p154, %s19, 1
          %s156 = smul.addr %s155, 8
          %s157 = scalar_lea.vmem %s0, %s156
        $region20: #{tpu_custom_call.1} parent=15 // pred_fallthru
          _
        // Predicated region
        $region21: #{tpu_custom_call.1} parent=15 // pred_check
          %p158 = pneg %p70
        $region22: #{tpu_custom_call.1} parent=15 // pred_check_branch
          %160 = sbr.rel (%p158) target = $region24
        $region23: #{tpu_custom_call.1} parent=15 // pred_region
          %p161 = scmp.lt.s32.totalorder %s19, 1
          %s162 = scalar_select %p161, %s19, 1
          %s163 = smul.addr %s162, 8
          %s164 = scalar_lea.vmem %s1, %s163
        $region24: #{tpu_custom_call.1} parent=15 // pred_fallthru
          _
        // Predicated region
        $region25: #{tpu_custom_call.1} parent=15 // pred_check
          %p165 = pneg %p98
        $region26: #{tpu_custom_call.1} parent=15 // pred_check_branch
          %167 = sbr.rel (%p165) target = $region28
        $region27: #{tpu_custom_call.1} parent=15 // pred_region
          %p168 = scmp.lt.s32.totalorder %s19, 1
          %s169 = scalar_select %p168, %s19, 1
          %p170 = scmp.lt.s32.totalorder %s20, 1
          %s171 = scalar_select %p170, %s20, 1
          %s172 = smul.addr %s169, 2
          %s173 = sadd.s32 %s171, %s172
          %s174 = smul.addr %s173, 8
          %s175 = scalar_lea.vmem %s2, %s174
        $region28: #{tpu_custom_call.1} parent=15 // pred_fallthru
          _
      $region16: #{tpu_custom_call.1} parent=5 // pred_fallthru
        _
      %p176 = scmp.le.s32.totalorder 1, %s12
      %p177 = scmp.lt.s32.totalorder %s12, 5
      %p178 = pnand %p176, %p177
      %p179 = pneg %p178
      // Predicated region
      $region29: #{tpu_custom_call.1} parent=5 // pred_check
        _
      $region30: #{tpu_custom_call.1} parent=5 // pred_check_branch
        %181 = sbr.rel (%p178) target = $region32
      $region31: #{tpu_custom_call.1} parent=5 // pred_region
        %s182 = ssub.s32 %s12, 1
        %p183 = scmp.lt.s32.totalorder %s21, 1
        %s184 = scalar_select %p183, %s21, 1
        %s185 = smul.addr %s184, 8
        %s186 = scalar_lea.vmem %s0, %s185
        %p187 = pneg %p50
        %p188 = pneg %p47
        %p189 = scmp.lt.s32.totalorder %s21, 1
        %s190 = scalar_select %p189, %s21, 1
        %s191 = smul.addr %s190, 8
        %s192 = scalar_lea.vmem %s1, %s191
        %p193 = pneg %p76
        %p194 = pneg %p73
        %p195 = scmp.lt.s32.totalorder %s21, 1
        %s196 = scalar_select %p195, %s21, 1
        %p197 = scmp.lt.s32.totalorder %s22, 1
        %s198 = scalar_select %p197, %s22, 1
        %s199 = smul.addr %s196, 2
        %s200 = sadd.s32 %s198, %s199
        %s201 = smul.addr %s200, 8
        %s202 = scalar_lea.vmem %s2, %s201
        %p203 = pneg %p104
        %p204 = pneg %p101
        %p205 = pneg %p132
        %p206 = pneg %p129
        %s207 = sand.u32 %s119, 1
        %s208 = scalar_lea.sflag [#allocation3], %s207
        %s209 = sand.u32 %s119, 1
        %s210 = smul.addr %s209, 8
        %s211 = scalar_lea.vmem [#allocation2], %s210
        %p212 = scmp.lt.s32.totalorder %s21, 1
        %s213 = scalar_select %p212, %s21, 1
        %s214 = smul.addr %s213, 8
        %s215 = scalar_lea.vmem %s0, %s214
        %p216 = scmp.lt.s32.totalorder %s21, 1
        %s217 = scalar_select %p216, %s21, 1
        %s218 = smul.addr %s217, 8
        %s219 = scalar_lea.vmem %s1, %s218
        %p220 = scmp.lt.s32.totalorder %s21, 1
        %s221 = scalar_select %p220, %s21, 1
        %p222 = scmp.lt.s32.totalorder %s22, 1
        %s223 = scalar_select %p222, %s22, 1
        %s224 = smul.addr %s221, 2
        %s225 = sadd.s32 %s223, %s224
        %s226 = smul.addr %s225, 8
        %s227 = scalar_lea.vmem %s2, %s226
        %v228 = vld [vmem:[%s227] sm:$0xff]
        %v229 = vmax.f32 %v228, -0.9999999
        %v230 = vmin.f32 %v229, 0.9999999
        %v231 = vld [vmem:[%s215] sm:$0xff]
        %s232 = smul.u32 %s22, 128
        %v233 = vstv %s232
        %v234 = vsub.s32 %v231, %v233
        %v235 = vlaneseq
        %v236 = vand.u32 %v235, 127
        %237 = vset.pattern.permute.xlu0 0
        %238 = vperm.xlu0 %237, %v234
        %v239 = vpop.permute.xlu0 %238
        %vm240 = vcmp.eq.s32.totalorder %v236, %v239
        %v241 = vld [vmem:[%s219] sm:$0xff]
        %v242 = vmul.f32 %v230, 64.0
        %244 = vset.pattern.permute.xlu0 0
        %245 = vperm.xlu0 %244, %v241
        %v246 = vpop.permute.xlu0 %245
        %v248 = vsel %vm240, %v246, %v242
        %249 = vst [vmem:[%s211] sm:$0xff] %v248
        %s250 = sand.u32 %s119, 1
        %s251 = scalar_lea.sflag [#allocation3], %s250
        %s252 = sand.u32 %s119, 1
        %s253 = smul.addr %s252, 8
        %s254 = scalar_lea.vmem [#allocation2], %s253
        // Predicated region
        $region33: #{tpu_custom_call.1} parent=31 // pred_check
          %p255 = pneg %p129
        $region34: #{tpu_custom_call.1} parent=31 // pred_check_branch
          %257 = sbr.rel (%p255) target = $region36
        $region35: #{tpu_custom_call.1} parent=31 // pred_region
          %s259 = ssub.s32 128, 128
          %260 = vsyncadd %s251, %s259
          %s261 = smul.addr %s21, 2
          %s262 = sadd.s32 %s22, %s261
          %s263 = smul.addr %s262, 128
          %s264 = scalar_lea.hbm %s3, %s263
          %s266 = sshll.u32 %s254, 4
          %s267 = int_to_ptr.vmem [resolvable:$true] %s266
          %269 = dma.vmem_to_hbm [thread:$0]  %s267, 128, %s264, %s251
        $region36: #{tpu_custom_call.1} parent=31 // pred_fallthru
          _
      $region32: #{tpu_custom_call.1} parent=5 // pred_fallthru
        _
      %p270 = scmp.le.s32.totalorder 2, %s12
      // Predicated region
      $region37: #{tpu_custom_call.1} parent=5 // pred_check
        %p271 = pneg %p270
      $region38: #{tpu_custom_call.1} parent=5 // pred_check_branch
        %273 = sbr.rel (%p271) target = $region40
      $region39: #{tpu_custom_call.1} parent=5 // pred_region
        %s274 = ssub.s32 %s12, 2
        // Predicated region
        $region41: #{tpu_custom_call.1} parent=39 // pred_check
          %p275 = pneg %p135
        $region42: #{tpu_custom_call.1} parent=39 // pred_check_branch
          %277 = sbr.rel (%p275) target = $region44
        $region43: #{tpu_custom_call.1} parent=39 // pred_region
          %s278 = sand.u32 %s120, 1
          %s279 = scalar_lea.sflag [#allocation3], %s278
          %s280 = sand.u32 %s120, 1
          %s281 = smul.addr %s280, 8
          %s282 = scalar_lea.vmem [#allocation2], %s281
          %283 = dma.done %s279, 128
        $region44: #{tpu_custom_call.1} parent=39 // pred_fallthru
          _
      $region40: #{tpu_custom_call.1} parent=5 // pred_fallthru
        _
    $region6: #{tpu_custom_call.1} parent=1 // loop_footer
      %s16 = sadd.s32 1, %s12
    $region7: #{tpu_custom_call.1} parent=1 // loop_footer_branch
      %11 = sbr.rel target = $region3
    $region8: #{tpu_custom_call.1} parent=1 // loop_exit
      _
    %284 = vsyncpa [#allocation3], 1
    %s285 = scalar_lea.sflag [#allocation3], 1
    %286 = vsyncpa %s285, 1

</llo_original>
